<compile_context>
chip_gen: v5e
topology: v5e:2x2
jax: 0.10.0
libtpu: 0.0.40
codegen_flags: <defaults>
</compile_context>

<pallas_src>
import functools

import jax
import jax.numpy as jnp
from jax.experimental import pallas as pl
from jax.experimental.pallas import tpu as pltpu


HIDDEN = 256
LANE = 128  # lane-dense padded width for the action output


def _round_up(x, m):
    return ((x + m - 1) // m) * m


def actor_kernel(x_ref, w1_ref, b1_ref, w2_ref, b2_ref, w3_ref, b3_ref,
                 out_ref, *, max_action):
    x = x_ref[...]                                                   # (TB, state_dim)

    h = jnp.dot(x, w1_ref[...], preferred_element_type=jnp.float32) + b1_ref[...]
    h = jnp.maximum(h, 0.0)                                          # (TB, 256)

    h = jnp.dot(h, w2_ref[...], preferred_element_type=jnp.float32) + b2_ref[...]
    h = jnp.maximum(h, 0.0)                                          # (TB, 256)

    a = jnp.dot(h, w3_ref[...], preferred_element_type=jnp.float32) + b3_ref[...]
    out_ref[...] = (max_action * jnp.tanh(a)).astype(out_ref.dtype)  # (TB, 128)


def actor_forward(state, params, action_dim, max_action, *, max_block_b=1024):
    """Pallas forward pass. Returns actions of shape (B, action_dim)."""
    B, sd = state.shape
    lane = params["w3"].shape[1]  # padded output width (128)

    # Batch tile: multiple of 8 sublanes, capped so tiles stay small in VMEM.
    tb = min(_round_up(B, 8), max_block_b)
    b_pad = _round_up(B, tb)
    if b_pad != B:
        state = jnp.pad(state, ((0, b_pad - B), (0, 0)))

    grid = (pl.cdiv(b_pad, tb),)
    kernel = functools.partial(actor_kernel, max_action=float(max_action))

    out = pl.pallas_call(
        kernel,
        out_shape=jax.ShapeDtypeStruct((b_pad, lane), jnp.float32),
        grid=grid,
        in_specs=[
            # Streamed input tile over the batch grid.
            pl.BlockSpec((tb, sd), lambda i: (i, 0)),
            # Weights / biases: full blocks, resident across grid steps.
            pl.BlockSpec((sd, HIDDEN), lambda i: (0, 0)),
            pl.BlockSpec((1, HIDDEN), lambda i: (0, 0)),
            pl.BlockSpec((HIDDEN, HIDDEN), lambda i: (0, 0)),
            pl.BlockSpec((1, HIDDEN), lambda i: (0, 0)),
            pl.BlockSpec((HIDDEN, lane), lambda i: (0, 0)),
            pl.BlockSpec((1, lane), lambda i: (0, 0)),
        ],
        out_specs=pl.BlockSpec((tb, lane), lambda i: (i, 0)),
        compiler_params=pltpu.CompilerParams(
            dimension_semantics=("parallel",)),
    )(state, params["w1"], params["b1"], params["w2"], params["b2"],
      params["w3"], params["b3"])

    return out[:B, :action_dim]


def init_actor_params(key, state_dim, action_dim):
    """Init matching torch.nn.Linear defaults: U(-1/sqrt(fan_in), 1/sqrt(fan_in)).
    Weights stored as (in_features, out_features); layer-3 weight/bias are
    zero-padded to LANE output columns for lane-dense stores."""
    k1, k2, k3, k4, k5, k6 = jax.random.split(key, 6)

    def u(k, shape, fan_in):
        bound = 1.0 / jnp.sqrt(jnp.float32(fan_in))
        return jax.random.uniform(k, shape, minval=-bound, maxval=bound,
                                  dtype=jnp.float32)

    w3 = u(k5, (HIDDEN, action_dim), HIDDEN)
    b3 = u(k6, (1, action_dim), HIDDEN)
    params = {
        "w1": u(k1, (state_dim, HIDDEN), state_dim),
        "b1": u(k2, (1, HIDDEN), state_dim),
        "w2": u(k3, (HIDDEN, HIDDEN), HIDDEN),
        "b2": u(k4, (1, HIDDEN), HIDDEN),
        # Zero-pad columns action_dim -> LANE (padded lanes produce tanh(0)=0
        # and are sliced off in the wrapper, so semantics are unchanged).
        "w3": jnp.pad(w3, ((0, 0), (0, LANE - action_dim))),
        "b3": jnp.pad(b3, ((0, 0), (0, LANE - action_dim))),
    }
    return params


def actor_reference(state, params, action_dim, max_action):
    """Plain-JAX reference matching the PyTorch Actor forward."""
    a = jax.nn.relu(state @ params["w1"] + params["b1"])
    a = jax.nn.relu(a @ params["w2"] + params["b2"])
    w3 = params["w3"][:, :action_dim]
    b3 = params["b3"][:, :action_dim]
    return max_action * jnp.tanh(a @ w3 + b3)


if __name__ == "__main__":
    key = jax.random.PRNGKey(0)
    k_params, k_state = jax.random.split(key, 2)

    batch = 8
    state_dim = 24
    action_dim = 8
    max_action = 2.0

    params = init_actor_params(k_params, state_dim, action_dim)
    state = jax.random.normal(k_state, (batch, state_dim), dtype=jnp.float32)

    act = actor_forward(state, params, action_dim, max_action)
    act = jax.block_until_ready(act)

    ref = actor_reference(state, params, action_dim, max_action)
    assert act.shape == (batch, action_dim)
    assert jnp.allclose(act, ref, atol=1e-4, rtol=1e-4), (
        float(jnp.max(jnp.abs(act - ref))))

    print("KERNEL_OK")
</pallas_src>

<mosaic_0001>
module attributes {stable_mosaic.version = 11 : i64} {
  func.func @actor_kernel(%arg0: i32, %arg1: memref<8x24xf32, #tpu.memory_space<vmem>>, %arg2: memref<24x256xf32, #tpu.memory_space<vmem>>, %arg3: memref<1x256xf32, #tpu.memory_space<vmem>>, %arg4: memref<256x256xf32, #tpu.memory_space<vmem>>, %arg5: memref<1x256xf32, #tpu.memory_space<vmem>>, %arg6: memref<256x128xf32, #tpu.memory_space<vmem>>, %arg7: memref<1x128xf32, #tpu.memory_space<vmem>>, %arg8: memref<8x128xf32, #tpu.memory_space<vmem>>) attributes {dimension_semantics = [#tpu.dimension_semantics<parallel>], iteration_bounds = array<i64: 1>, scalar_prefetch = 0 : i64, scratch_operands = 0 : i64, tpu.core_type = #tpu.core_type<tc>, window_params = [{transform_indices = @transform_0, window_bounds = array<i64: 8, 24>}, {pipeline_mode = #tpu.pipeline_mode<synchronous>, transform_indices = @transform_1, window_bounds = array<i64: 24, 256>}, {pipeline_mode = #tpu.pipeline_mode<synchronous>, transform_indices = @transform_2, window_bounds = array<i64: 1, 256>}, {pipeline_mode = #tpu.pipeline_mode<synchronous>, transform_indices = @transform_3, window_bounds = array<i64: 256, 256>}, {pipeline_mode = #tpu.pipeline_mode<synchronous>, transform_indices = @transform_4, window_bounds = array<i64: 1, 256>}, {pipeline_mode = #tpu.pipeline_mode<synchronous>, transform_indices = @transform_5, window_bounds = array<i64: 256, 128>}, {pipeline_mode = #tpu.pipeline_mode<synchronous>, transform_indices = @transform_6, window_bounds = array<i64: 1, 128>}, {transform_indices = @transform_7, window_bounds = array<i64: 8, 128>}]} {
    %c0 = arith.constant 0 : index
    %c0_0 = arith.constant 0 : index
    %0 = vector.load %arg1[%c0, %c0_0] : memref<8x24xf32, #tpu.memory_space<vmem>>, vector<8x24xf32>
    %c0_1 = arith.constant 0 : index
    %c0_2 = arith.constant 0 : index
    %1 = vector.load %arg2[%c0_1, %c0_2] : memref<24x256xf32, #tpu.memory_space<vmem>>, vector<24x256xf32>
    %cst = arith.constant dense<0.000000e+00> : vector<8x256xf32>
    %2 = tpu.matmul %0, %1, %cst {dimension_numbers = #tpu.dot_dimension_numbers<[1], [0], [0], [1], [0, 0, 1, 1], [], []>} : vector<8x24xf32>, vector<24x256xf32>, vector<8x256xf32> -> vector<8x256xf32>
    %c0_3 = arith.constant 0 : index
    %c0_4 = arith.constant 0 : index
    %3 = vector.load %arg3[%c0_3, %c0_4] : memref<1x256xf32, #tpu.memory_space<vmem>>, vector<1x256xf32>
    %4 = vector.broadcast %3 : vector<1x256xf32> to vector<8x256xf32>
    %5 = arith.addf %2, %4 : vector<8x256xf32>
    %cst_5 = arith.constant 0.000000e+00 : f32
    %6 = vector.broadcast %cst_5 : f32 to vector<8x256xf32>
    %7 = arith.maximumf %5, %6 : vector<8x256xf32>
    %c0_6 = arith.constant 0 : index
    %c0_7 = arith.constant 0 : index
    %8 = vector.load %arg4[%c0_6, %c0_7] : memref<256x256xf32, #tpu.memory_space<vmem>>, vector<256x256xf32>
    %cst_8 = arith.constant dense<0.000000e+00> : vector<8x256xf32>
    %9 = tpu.matmul %7, %8, %cst_8 {dimension_numbers = #tpu.dot_dimension_numbers<[1], [0], [0], [1], [0, 0, 1, 1], [], []>} : vector<8x256xf32>, vector<256x256xf32>, vector<8x256xf32> -> vector<8x256xf32>
    %c0_9 = arith.constant 0 : index
    %c0_10 = arith.constant 0 : index
    %10 = vector.load %arg5[%c0_9, %c0_10] : memref<1x256xf32, #tpu.memory_space<vmem>>, vector<1x256xf32>
    %11 = vector.broadcast %10 : vector<1x256xf32> to vector<8x256xf32>
    %12 = arith.addf %9, %11 : vector<8x256xf32>
    %cst_11 = arith.constant 0.000000e+00 : f32
    %13 = vector.broadcast %cst_11 : f32 to vector<8x256xf32>
    %14 = arith.maximumf %12, %13 : vector<8x256xf32>
    %c0_12 = arith.constant 0 : index
    %c0_13 = arith.constant 0 : index
    %15 = vector.load %arg6[%c0_12, %c0_13] : memref<256x128xf32, #tpu.memory_space<vmem>>, vector<256x128xf32>
    %cst_14 = arith.constant dense<0.000000e+00> : vector<8x128xf32>
    %16 = tpu.matmul %14, %15, %cst_14 {dimension_numbers = #tpu.dot_dimension_numbers<[1], [0], [0], [1], [0, 0, 1, 1], [], []>} : vector<8x256xf32>, vector<256x128xf32>, vector<8x128xf32> -> vector<8x128xf32>
    %c0_15 = arith.constant 0 : index
    %c0_16 = arith.constant 0 : index
    %17 = vector.load %arg7[%c0_15, %c0_16] : memref<1x128xf32, #tpu.memory_space<vmem>>, vector<1x128xf32>
    %18 = vector.broadcast %17 : vector<1x128xf32> to vector<8x128xf32>
    %19 = arith.addf %16, %18 : vector<8x128xf32>
    %20 = math.tanh %19 : vector<8x128xf32>
    %cst_17 = arith.constant 2.000000e+00 : f32
    %21 = vector.broadcast %cst_17 : f32 to vector<8x128xf32>
    %22 = arith.mulf %21, %20 : vector<8x128xf32>
    %c0_18 = arith.constant 0 : index
    %c0_19 = arith.constant 0 : index
    %23 = vector.load %arg8[%c0_18, %c0_19] : memref<8x128xf32, #tpu.memory_space<vmem>>, vector<8x128xf32>
    tpu.vector_store %arg8[%c0_18, %c0_19], %22 {strides = array<i32>} : memref<8x128xf32, #tpu.memory_space<vmem>>, vector<8x128xf32>,
    return
  }
  func.func @transform_0(%arg0: i32) -> (i32, i32) {
    %c0_i32 = arith.constant 0 : i32
    %c0_i32_0 = arith.constant 0 : i32
    return %arg0, %c0_i32 : i32, i32
  }
  func.func @transform_1(%arg0: i32) -> (i32, i32) {
    %c0_i32 = arith.constant 0 : i32
    %c0_i32_0 = arith.constant 0 : i32
    %c0_i32_1 = arith.constant 0 : i32
    return %c0_i32, %c0_i32_0 : i32, i32
  }
  func.func @transform_2(%arg0: i32) -> (i32, i32) {
    %c0_i32 = arith.constant 0 : i32
    %c0_i32_0 = arith.constant 0 : i32
    %c0_i32_1 = arith.constant 0 : i32
    return %c0_i32, %c0_i32_0 : i32, i32
  }
  func.func @transform_3(%arg0: i32) -> (i32, i32) {
    %c0_i32 = arith.constant 0 : i32
    %c0_i32_0 = arith.constant 0 : i32
    %c0_i32_1 = arith.constant 0 : i32
    return %c0_i32, %c0_i32_0 : i32, i32
  }
  func.func @transform_4(%arg0: i32) -> (i32, i32) {
    %c0_i32 = arith.constant 0 : i32
    %c0_i32_0 = arith.constant 0 : i32
    %c0_i32_1 = arith.constant 0 : i32
    return %c0_i32, %c0_i32_0 : i32, i32
  }
  func.func @transform_5(%arg0: i32) -> (i32, i32) {
    %c0_i32 = arith.constant 0 : i32
    %c0_i32_0 = arith.constant 0 : i32
    %c0_i32_1 = arith.constant 0 : i32
    return %c0_i32, %c0_i32_0 : i32, i32
  }
  func.func @transform_6(%arg0: i32) -> (i32, i32) {
    %c0_i32 = arith.constant 0 : i32
    %c0_i32_0 = arith.constant 0 : i32
    %c0_i32_1 = arith.constant 0 : i32
    return %c0_i32, %c0_i32_0 : i32, i32
  }
  func.func @transform_7(%arg0: i32) -> (i32, i32) {
    %c0_i32 = arith.constant 0 : i32
    %c0_i32_0 = arith.constant 0 : i32
    return %arg0, %c0_i32 : i32, i32
  }
}

</mosaic_0001>

<llo_original>
// kernel: tpu_custom_call.1
$region0: #{tpu_custom_call.1}
  #allocation0 [shape = 'u32[]', space=smem, size = 0x4, offset = 0x4, fixed_abs, tag = 'smem constant byte address 0x4 - core index']
  #allocation1 [shape = 'u32[72,128]{1,0:T(1,128)}', space=vmem, size = 0x9000, scoped, tag = 'internal scratch']
  %s0 = inlined_call_operand.hbm [shape: f32[8,24], index: 0, kind: input, shape index: {}]
  %s1 = inlined_call_operand.hbm [shape: f32[24,256], index: 1, kind: input, shape index: {}]
  %s2 = inlined_call_operand.hbm [shape: f32[1,256], index: 2, kind: input, shape index: {}]
  %s3 = inlined_call_operand.hbm [shape: f32[256,256], index: 3, kind: input, shape index: {}]
  %s4 = inlined_call_operand.vmem [shape: f32[1,256], index: 4, kind: input, shape index: {}]
  %s5 = inlined_call_operand.hbm [shape: f32[256,128], index: 5, kind: input, shape index: {}]
  %s6 = inlined_call_operand.vmem [shape: f32[1,128], index: 6, kind: input, shape index: {}]
  %s7 = inlined_call_operand.hbm [shape: f32[8,128], index: 7, kind: output, shape index: {}]
  %s8 = sld [smem:[#allocation0]]
  $region58: #{tpu_custom_call.1} parent=0
    _
  %s10 = ssub.s32 1, %s8
  %s11 = scalar_select 0, %s10, %s8
  $region1: #{tpu_custom_call.1} parent=0
    #allocation2 [shape = 'u8[4096]{0}', space=vmem, size = 0x1000, scoped, tag = 'input window, operand 0, single buffered']
    #allocation3 [shape = 's32[1]{0}', space=sflag, size = 0x4, scoped, tag = 'scoped memory for tpu_custom_call.1']
    #allocation4 [shape = 's32[1]{0}', space=sflag, size = 0x4, scoped, tag = 'scoped memory for tpu_custom_call.1']
    #allocation5 [shape = 'u8[24576]{0}', space=vmem, size = 0x6000, scoped, tag = 'input window, operand 1, single buffered']
    #allocation6 [shape = 's32[1]{0}', space=sflag, size = 0x4, scoped, tag = 'scoped memory for tpu_custom_call.1']
    #allocation7 [shape = 'u8[1024]{0}', space=vmem, size = 0x400, scoped, tag = 'input window, operand 2, single buffered']
    #allocation8 [shape = 'u8[262144]{0}', space=vmem, size = 0x40000, scoped, tag = 'input window, operand 3, single buffered']
    #allocation9 [shape = 's32[1]{0}', space=sflag, size = 0x4, scoped, tag = 'scoped memory for tpu_custom_call.1']
    #allocation10 [shape = 'u8[131072]{0}', space=vmem, size = 0x20000, scoped, tag = 'input window, operand 5, single buffered']
    #allocation11 [shape = 'u8[4096]{0}', space=vmem, size = 0x1000, scoped, tag = 'output window, operand 0, single buffered']
    %12 = vsyncpa [#allocation3], 0
    %13 = vsyncpa [#allocation6], 0
    %14 = vsyncpa [#allocation9], 0
    %15 = vsyncpa [#allocation4], 0
    // Predicated region
    $region2: #{tpu_custom_call.1} parent=1 // pred_check
      _
    $region3: #{tpu_custom_call.1} parent=1 // pred_check_branch
      %17 = sbr.rel (0) target = $region5
    $region4: #{tpu_custom_call.1} parent=1 // pred_region
      %19 = vsyncadd [#allocation3], 0
      %s21 = sshll.u32 %s0, 4
      %s22 = int_to_ptr.hbm [resolvable:$true] %s21
      %s23 = sshll.u32 [#allocation2], 4
      %s24 = int_to_ptr.vmem [resolvable:$true] %s23
      %26 = dma.hbm_to_vmem [thread:$0]  %s22, 128, %s24, [#allocation3]
    $region5: #{tpu_custom_call.1} parent=1 // pred_fallthru
      _
    // Predicated region
    $region6: #{tpu_custom_call.1} parent=1 // pred_check
      _
    $region7: #{tpu_custom_call.1} parent=1 // pred_check_branch
      %28 = sbr.rel (0) target = $region9
    $region8: #{tpu_custom_call.1} parent=1 // pred_region
      %30 = vsyncadd [#allocation6], 0
      %s31 = sshll.u32 %s1, 4
      %s32 = int_to_ptr.hbm [resolvable:$true] %s31
      %s33 = sshll.u32 [#allocation5], 4
      %s34 = int_to_ptr.vmem [resolvable:$true] %s33
      %39 = dma.hbm_to_vmem [thread:$0]  %s32, 768, %s34, [#allocation6], 256, 256, 16
    $region9: #{tpu_custom_call.1} parent=1 // pred_fallthru
      _
    // Predicated region
    $region10: #{tpu_custom_call.1} parent=1 // pred_check
      _
    $region11: #{tpu_custom_call.1} parent=1 // pred_check_branch
      %41 = sbr.rel (0) target = $region13
    $region12: #{tpu_custom_call.1} parent=1 // pred_region
      %43 = vsyncadd [#allocation6], 0
      %s45 = sshll.u32 %s2, 4
      %s46 = int_to_ptr.hbm [resolvable:$true] %s45
      %s47 = sshll.u32 [#allocation7], 4
      %s48 = int_to_ptr.vmem [resolvable:$true] %s47
      %50 = dma.hbm_to_vmem [thread:$0]  %s46, 32, %s48, [#allocation6]
    $region13: #{tpu_custom_call.1} parent=1 // pred_fallthru
      _
    // Predicated region
    $region14: #{tpu_custom_call.1} parent=1 // pred_check
      _
    $region15: #{tpu_custom_call.1} parent=1 // pred_check_branch
      %52 = sbr.rel (0) target = $region17
    $region16: #{tpu_custom_call.1} parent=1 // pred_region
      %54 = vsyncadd [#allocation9], 0
      %s55 = sshll.u32 %s3, 4
      %s56 = int_to_ptr.hbm [resolvable:$true] %s55
      %s57 = sshll.u32 [#allocation8], 4
      %s58 = int_to_ptr.vmem [resolvable:$true] %s57
      %63 = dma.hbm_to_vmem [thread:$0]  %s56, 8192, %s58, [#allocation9], 256, 256, 16
    $region17: #{tpu_custom_call.1} parent=1 // pred_fallthru
      _
    // Predicated region
    $region18: #{tpu_custom_call.1} parent=1 // pred_check
      _
    $region19: #{tpu_custom_call.1} parent=1 // pred_check_branch
      %65 = sbr.rel (0) target = $region21
    $region20: #{tpu_custom_call.1} parent=1 // pred_region
      _
    $region21: #{tpu_custom_call.1} parent=1 // pred_fallthru
      _
    // Predicated region
    $region22: #{tpu_custom_call.1} parent=1 // pred_check
      _
    $region23: #{tpu_custom_call.1} parent=1 // pred_check_branch
      %67 = sbr.rel (0) target = $region25
    $region24: #{tpu_custom_call.1} parent=1 // pred_region
      %69 = vsyncadd [#allocation9], 0
      %s70 = sshll.u32 %s5, 4
      %s71 = int_to_ptr.hbm [resolvable:$true] %s70
      %s72 = sshll.u32 [#allocation10], 4
      %s73 = int_to_ptr.vmem [resolvable:$true] %s72
      %78 = dma.hbm_to_vmem [thread:$0]  %s71, 4096, %s73, [#allocation9], 128, 128, 8
    $region25: #{tpu_custom_call.1} parent=1 // pred_fallthru
      _
    // Predicated region
    $region26: #{tpu_custom_call.1} parent=1 // pred_check
      _
    $region27: #{tpu_custom_call.1} parent=1 // pred_check_branch
      %80 = sbr.rel (0) target = $region29
    $region28: #{tpu_custom_call.1} parent=1 // pred_region
      _
    $region29: #{tpu_custom_call.1} parent=1 // pred_fallthru
      _
    // Predicated region
    $region30: #{tpu_custom_call.1} parent=1 // pred_check
      _
    $region31: #{tpu_custom_call.1} parent=1 // pred_check_branch
      %82 = sbr.rel (0) target = $region33
    $region32: #{tpu_custom_call.1} parent=1 // pred_region
      %84 = dma.done [#allocation3], 128
    $region33: #{tpu_custom_call.1} parent=1 // pred_fallthru
      _
    // Predicated region
    $region34: #{tpu_custom_call.1} parent=1 // pred_check
      _
    $region35: #{tpu_custom_call.1} parent=1 // pred_check_branch
      %86 = sbr.rel (0) target = $region37
    $region36: #{tpu_custom_call.1} parent=1 // pred_region
      %88 = dma.done [#allocation6], 768
    $region37: #{tpu_custom_call.1} parent=1 // pred_fallthru
      _
    // Predicated region
    $region38: #{tpu_custom_call.1} parent=1 // pred_check
      _
    $region39: #{tpu_custom_call.1} parent=1 // pred_check_branch
      %90 = sbr.rel (0) target = $region41
    $region40: #{tpu_custom_call.1} parent=1 // pred_region
      %92 = dma.done [#allocation6], 32
    $region41: #{tpu_custom_call.1} parent=1 // pred_fallthru
      _
    // Predicated region
    $region42: #{tpu_custom_call.1} parent=1 // pred_check
      _
    $region43: #{tpu_custom_call.1} parent=1 // pred_check_branch
      %94 = sbr.rel (0) target = $region45
    $region44: #{tpu_custom_call.1} parent=1 // pred_region
      %96 = dma.done [#allocation9], 8192
    $region45: #{tpu_custom_call.1} parent=1 // pred_fallthru
      _
    // Predicated region
    $region46: #{tpu_custom_call.1} parent=1 // pred_check
      _
    $region47: #{tpu_custom_call.1} parent=1 // pred_check_branch
      %98 = sbr.rel (0) target = $region49
    $region48: #{tpu_custom_call.1} parent=1 // pred_region
      %100 = dma.done [#allocation9], 4096
    $region49: #{tpu_custom_call.1} parent=1 // pred_fallthru
      _
    %v101 = vld [vmem:[#allocation2] sm:$0xff]
    %v102 = vld [vmem:[#allocation5] sm:$0xff]
    %v103 = vld [vmem:[#allocation5 + $0x8] sm:$0xff]
    %v104 = vld [vmem:[#allocation5 + $0x10] sm:$0xff]
    %v105 = vld [vmem:[#allocation5 + $0x18] sm:$0xff]
    %v106 = vld [vmem:[#allocation5 + $0x20] sm:$0xff]
    %v107 = vld [vmem:[#allocation5 + $0x28] sm:$0xff]
    %v108 = vld [vmem:[#allocation7] sm:$0x3]
    %v110 = vperm.slane %v108, 0
    %v111 = vperm.slane %v108, 1
    %vm114 = vcmask 195584
    %v116 = vsel %vm114, %v101, 0
    %118 = vmatpush.msra.mxu0 0.0
    %119 = vmatpush.msra.mxu0 0.0
    %120 = vmatpush.msra.mxu0 0.0
    %121 = vmatpush.msra.mxu0 0.0
    %122 = vmatpush.msra.mxu0 0.0
    %123 = vmatpush.msra.mxu0 0.0
    %124 = vmatpush.msra.mxu0 0.0
    %125 = vmatpush.msra.mxu0 0.0
    %126 = vmatpush.msra.mxu0 0.0
    %127 = vmatpush.msra.mxu0 0.0
    %128 = vmatpush.msra.mxu0 0.0
    %129 = vmatpush.msra.mxu0 0.0
    %130 = vmatpush.msra.mxu0 0.0
    %131 = vmatpush.msra.mxu0 %v106
    %132 = vmatpush.msra.mxu0 %v104
    %133 = vmatpush.msra.mxu0 %v102
    %134 = vmatmul.f32.gmra.mxu0 %v116
    %v135 = vpop.f32.mrf.mxu0
    %v136 = vadd.f32 %v110, %v135
    %137 = vdwg.mxu0
    %138 = vmatpush.msra.mxu0 0.0
    %139 = vmatpush.msra.mxu0 0.0
    %140 = vmatpush.msra.mxu0 0.0
    %141 = vmatpush.msra.mxu0 0.0
    %142 = vmatpush.msra.mxu0 0.0
    %143 = vmatpush.msra.mxu0 0.0
    %144 = vmatpush.msra.mxu0 0.0
    %145 = vmatpush.msra.mxu0 0.0
    %146 = vmatpush.msra.mxu0 0.0
    %147 = vmatpush.msra.mxu0 0.0
    %148 = vmatpush.msra.mxu0 0.0
    %149 = vmatpush.msra.mxu0 0.0
    %150 = vmatpush.msra.mxu0 0.0
    %151 = vmatpush.msra.mxu0 %v107
    %152 = vmatpush.msra.mxu0 %v105
    %153 = vmatpush.msra.mxu0 %v103
    %154 = vmatmul.f32.gmra.mxu0 %v116
    %v155 = vpop.f32.mrf.mxu0
    %v156 = vadd.f32 %v111, %v155
    %157 = vdwg.mxu0
    %v158 = vmax.f32 %v136, 0.0
    %v159 = vmax.f32 %v156, 0.0
    %v160 = vld [vmem:[#allocation8] sm:$0xff]
    %v161 = vld [vmem:[#allocation8 + $0x8] sm:$0xff]
    %v162 = vld [vmem:[#allocation8 + $0x10] sm:$0xff]
    %v163 = vld [vmem:[#allocation8 + $0x18] sm:$0xff]
    %v164 = vld [vmem:[#allocation8 + $0x20] sm:$0xff]
    %v165 = vld [vmem:[#allocation8 + $0x28] sm:$0xff]
    %v166 = vld [vmem:[#allocation8 + $0x30] sm:$0xff]
    %v167 = vld [vmem:[#allocation8 + $0x38] sm:$0xff]
    %v168 = vld [vmem:[#allocation8 + $0x40] sm:$0xff]
    %v169 = vld [vmem:[#allocation8 + $0x48] sm:$0xff]
    %v170 = vld [vmem:[#allocation8 + $0x50] sm:$0xff]
    %v171 = vld [vmem:[#allocation8 + $0x58] sm:$0xff]
    %v172 = vld [vmem:[#allocation8 + $0x60] sm:$0xff]
    %v173 = vld [vmem:[#allocation8 + $0x68] sm:$0xff]
    %v174 = vld [vmem:[#allocation8 + $0x70] sm:$0xff]
    %v175 = vld [vmem:[#allocation8 + $0x78] sm:$0xff]
    %v176 = vld [vmem:[#allocation8 + $0x80] sm:$0xff]
    %v177 = vld [vmem:[#allocation8 + $0x88] sm:$0xff]
    %v178 = vld [vmem:[#allocation8 + $0x90] sm:$0xff]
    %v179 = vld [vmem:[#allocation8 + $0x98] sm:$0xff]
    %v180 = vld [vmem:[#allocation8 + $0xa0] sm:$0xff]
    %v181 = vld [vmem:[#allocation8 + $0xa8] sm:$0xff]
    %v182 = vld [vmem:[#allocation8 + $0xb0] sm:$0xff]
    %v183 = vld [vmem:[#allocation8 + $0xb8] sm:$0xff]
    %v184 = vld [vmem:[#allocation8 + $0xc0] sm:$0xff]
    %v185 = vld [vmem:[#allocation8 + $0xc8] sm:$0xff]
    %v186 = vld [vmem:[#allocation8 + $0xd0] sm:$0xff]
    %v187 = vld [vmem:[#allocation8 + $0xd8] sm:$0xff]
    %v188 = vld [vmem:[#allocation8 + $0xe0] sm:$0xff]
    %v189 = vld [vmem:[#allocation8 + $0xe8] sm:$0xff]
    %v190 = vld [vmem:[#allocation8 + $0xf0] sm:$0xff]
    %v191 = vld [vmem:[#allocation8 + $0xf8] sm:$0xff]
    %v192 = vld [vmem:[#allocation8 + $0x100] sm:$0xff]
    %v193 = vld [vmem:[#allocation8 + $0x108] sm:$0xff]
    %v194 = vld [vmem:[#allocation8 + $0x110] sm:$0xff]
    %v195 = vld [vmem:[#allocation8 + $0x118] sm:$0xff]
    %v196 = vld [vmem:[#allocation8 + $0x120] sm:$0xff]
    %v197 = vld [vmem:[#allocation8 + $0x128] sm:$0xff]
    %v198 = vld [vmem:[#allocation8 + $0x130] sm:$0xff]
    %v199 = vld [vmem:[#allocation8 + $0x138] sm:$0xff]
    %v200 = vld [vmem:[#allocation8 + $0x140] sm:$0xff]
    %v201 = vld [vmem:[#allocation8 + $0x148] sm:$0xff]
    %v202 = vld [vmem:[#allocation8 + $0x150] sm:$0xff]
    %v203 = vld [vmem:[#allocation8 + $0x158] sm:$0xff]
    %v204 = vld [vmem:[#allocation8 + $0x160] sm:$0xff]
    %v205 = vld [vmem:[#allocation8 + $0x168] sm:$0xff]
    %v206 = vld [vmem:[#allocation8 + $0x170] sm:$0xff]
    %v207 = vld [vmem:[#allocation8 + $0x178] sm:$0xff]
    %v208 = vld [vmem:[#allocation8 + $0x180] sm:$0xff]
    %v209 = vld [vmem:[#allocation8 + $0x188] sm:$0xff]
    %v210 = vld [vmem:[#allocation8 + $0x190] sm:$0xff]
    %v211 = vld [vmem:[#allocation8 + $0x198] sm:$0xff]
    %v212 = vld [vmem:[#allocation8 + $0x1a0] sm:$0xff]
    %v213 = vld [vmem:[#allocation8 + $0x1a8] sm:$0xff]
    %v214 = vld [vmem:[#allocation8 + $0x1b0] sm:$0xff]
    %v215 = vld [vmem:[#allocation8 + $0x1b8] sm:$0xff]
    %v216 = vld [vmem:[#allocation8 + $0x1c0] sm:$0xff]
    %v217 = vld [vmem:[#allocation8 + $0x1c8] sm:$0xff]
    %v218 = vld [vmem:[#allocation8 + $0x1d0] sm:$0xff]
    %v219 = vld [vmem:[#allocation8 + $0x1d8] sm:$0xff]
    %v220 = vld [vmem:[#allocation8 + $0x1e0] sm:$0xff]
    %v221 = vld [vmem:[#allocation8 + $0x1e8] sm:$0xff]
    %v222 = vld [vmem:[#allocation8 + $0x1f0] sm:$0xff]
    %v223 = vld [vmem:[#allocation8 + $0x1f8] sm:$0xff]
    %v224 = vld [vmem:[%s4] sm:$0x3]
    %v226 = vperm.slane %v224, 0
    %v227 = vperm.slane %v224, 1
    %230 = vmatpush.msra.mxu0 %v190
    %231 = vmatpush.msra.mxu0 %v188
    %232 = vmatpush.msra.mxu0 %v186
    %233 = vmatpush.msra.mxu0 %v184
    %234 = vmatpush.msra.mxu0 %v182
    %235 = vmatpush.msra.mxu0 %v180
    %236 = vmatpush.msra.mxu0 %v178
    %237 = vmatpush.msra.mxu0 %v176
    %238 = vmatpush.msra.mxu0 %v174
    %239 = vmatpush.msra.mxu0 %v172
    %240 = vmatpush.msra.mxu0 %v170
    %241 = vmatpush.msra.mxu0 %v168
    %242 = vmatpush.msra.mxu0 %v166
    %243 = vmatpush.msra.mxu0 %v164
    %244 = vmatpush.msra.mxu0 %v162
    %245 = vmatpush.msra.mxu0 %v160
    %246 = vmatmul.f32.gmra.mxu0 %v158
    %v247 = vpop.f32.mrf.mxu0
    %v248 = vadd.f32 %v226, %v247
    %249 = vdwg.mxu0
    %250 = vmatpush.msra.mxu0 %v222
    %251 = vmatpush.msra.mxu0 %v220
    %252 = vmatpush.msra.mxu0 %v218
    %253 = vmatpush.msra.mxu0 %v216
    %254 = vmatpush.msra.mxu0 %v214
    %255 = vmatpush.msra.mxu0 %v212
    %256 = vmatpush.msra.mxu0 %v210
    %257 = vmatpush.msra.mxu0 %v208
    %258 = vmatpush.msra.mxu0 %v206
    %259 = vmatpush.msra.mxu0 %v204
    %260 = vmatpush.msra.mxu0 %v202
    %261 = vmatpush.msra.mxu0 %v200
    %262 = vmatpush.msra.mxu0 %v198
    %263 = vmatpush.msra.mxu0 %v196
    %264 = vmatpush.msra.mxu0 %v194
    %265 = vmatpush.msra.mxu0 %v192
    %266 = vmatmul.f32.gmra.mxu0 %v159
    %v267 = vpop.f32.mrf.mxu0
    %v268 = vadd.f32 %v248, %v267
    %269 = vdwg.mxu0
    %270 = vmatpush.msra.mxu0 %v191
    %271 = vmatpush.msra.mxu0 %v189
    %272 = vmatpush.msra.mxu0 %v187
    %273 = vmatpush.msra.mxu0 %v185
    %274 = vmatpush.msra.mxu0 %v183
    %275 = vmatpush.msra.mxu0 %v181
    %276 = vmatpush.msra.mxu0 %v179
    %277 = vmatpush.msra.mxu0 %v177
    %278 = vmatpush.msra.mxu0 %v175
    %279 = vmatpush.msra.mxu0 %v173
    %280 = vmatpush.msra.mxu0 %v171
    %281 = vmatpush.msra.mxu0 %v169
    %282 = vmatpush.msra.mxu0 %v167
    %283 = vmatpush.msra.mxu0 %v165
    %284 = vmatpush.msra.mxu0 %v163
    %285 = vmatpush.msra.mxu0 %v161
    %286 = vmatmul.f32.gmra.mxu0 %v158
    %v287 = vpop.f32.mrf.mxu0
    %v288 = vadd.f32 %v227, %v287
    %289 = vdwg.mxu0
    %290 = vmatpush.msra.mxu0 %v223
    %291 = vmatpush.msra.mxu0 %v221
    %292 = vmatpush.msra.mxu0 %v219
    %293 = vmatpush.msra.mxu0 %v217
    %294 = vmatpush.msra.mxu0 %v215
    %295 = vmatpush.msra.mxu0 %v213
    %296 = vmatpush.msra.mxu0 %v211
    %297 = vmatpush.msra.mxu0 %v209
    %298 = vmatpush.msra.mxu0 %v207
    %299 = vmatpush.msra.mxu0 %v205
    %300 = vmatpush.msra.mxu0 %v203
    %301 = vmatpush.msra.mxu0 %v201
    %302 = vmatpush.msra.mxu0 %v199
    %303 = vmatpush.msra.mxu0 %v197
    %304 = vmatpush.msra.mxu0 %v195
    %305 = vmatpush.msra.mxu0 %v193
    %306 = vmatmul.f32.gmra.mxu0 %v159
    %v307 = vpop.f32.mrf.mxu0
    %v308 = vadd.f32 %v288, %v307
    %309 = vdwg.mxu0
    %v310 = vmax.f32 %v268, 0.0
    %v311 = vmax.f32 %v308, 0.0
    %v312 = vld [vmem:[#allocation10] sm:$0xff]
    %v313 = vld [vmem:[#allocation10 + $0x8] sm:$0xff]
    %v314 = vld [vmem:[#allocation10 + $0x10] sm:$0xff]
    %v315 = vld [vmem:[#allocation10 + $0x18] sm:$0xff]
    %v316 = vld [vmem:[#allocation10 + $0x20] sm:$0xff]
    %v317 = vld [vmem:[#allocation10 + $0x28] sm:$0xff]
    %v318 = vld [vmem:[#allocation10 + $0x30] sm:$0xff]
    %v319 = vld [vmem:[#allocation10 + $0x38] sm:$0xff]
    %v320 = vld [vmem:[#allocation10 + $0x40] sm:$0xff]
    %v321 = vld [vmem:[#allocation10 + $0x48] sm:$0xff]
    %v322 = vld [vmem:[#allocation10 + $0x50] sm:$0xff]
    %v323 = vld [vmem:[#allocation10 + $0x58] sm:$0xff]
    %v324 = vld [vmem:[#allocation10 + $0x60] sm:$0xff]
    %v325 = vld [vmem:[#allocation10 + $0x68] sm:$0xff]
    %v326 = vld [vmem:[#allocation10 + $0x70] sm:$0xff]
    %v327 = vld [vmem:[#allocation10 + $0x78] sm:$0xff]
    %v328 = vld [vmem:[#allocation10 + $0x80] sm:$0xff]
    %v329 = vld [vmem:[#allocation10 + $0x88] sm:$0xff]
    %v330 = vld [vmem:[#allocation10 + $0x90] sm:$0xff]
    %v331 = vld [vmem:[#allocation10 + $0x98] sm:$0xff]
    %v332 = vld [vmem:[#allocation10 + $0xa0] sm:$0xff]
    %v333 = vld [vmem:[#allocation10 + $0xa8] sm:$0xff]
    %v334 = vld [vmem:[#allocation10 + $0xb0] sm:$0xff]
    %v335 = vld [vmem:[#allocation10 + $0xb8] sm:$0xff]
    %v336 = vld [vmem:[#allocation10 + $0xc0] sm:$0xff]
    %v337 = vld [vmem:[#allocation10 + $0xc8] sm:$0xff]
    %v338 = vld [vmem:[#allocation10 + $0xd0] sm:$0xff]
    %v339 = vld [vmem:[#allocation10 + $0xd8] sm:$0xff]
    %v340 = vld [vmem:[#allocation10 + $0xe0] sm:$0xff]
    %v341 = vld [vmem:[#allocation10 + $0xe8] sm:$0xff]
    %v342 = vld [vmem:[#allocation10 + $0xf0] sm:$0xff]
    %v343 = vld [vmem:[#allocation10 + $0xf8] sm:$0xff]
    %v344 = vld [vmem:[%s6] sm:$0x1]
    %v346 = vperm.slane %v344, 0
    %348 = vmatpush.msra.mxu0 %v327
    %349 = vmatpush.msra.mxu0 %v326
    %350 = vmatpush.msra.mxu0 %v325
    %351 = vmatpush.msra.mxu0 %v324
    %352 = vmatpush.msra.mxu0 %v323
    %353 = vmatpush.msra.mxu0 %v322
    %354 = vmatpush.msra.mxu0 %v321
    %355 = vmatpush.msra.mxu0 %v320
    %356 = vmatpush.msra.mxu0 %v319
    %357 = vmatpush.msra.mxu0 %v318
    %358 = vmatpush.msra.mxu0 %v317
    %359 = vmatpush.msra.mxu0 %v316
    %360 = vmatpush.msra.mxu0 %v315
    %361 = vmatpush.msra.mxu0 %v314
    %362 = vmatpush.msra.mxu0 %v313
    %363 = vmatpush.msra.mxu0 %v312
    %364 = vmatmul.f32.gmra.mxu0 %v310
    %v365 = vpop.f32.mrf.mxu0
    %v366 = vadd.f32 %v346, %v365
    %367 = vdwg.mxu0
    %368 = vmatpush.msra.mxu0 %v343
    %369 = vmatpush.msra.mxu0 %v342
    %370 = vmatpush.msra.mxu0 %v341
    %371 = vmatpush.msra.mxu0 %v340
    %372 = vmatpush.msra.mxu0 %v339
    %373 = vmatpush.msra.mxu0 %v338
    %374 = vmatpush.msra.mxu0 %v337
    %375 = vmatpush.msra.mxu0 %v336
    %376 = vmatpush.msra.mxu0 %v335
    %377 = vmatpush.msra.mxu0 %v334
    %378 = vmatpush.msra.mxu0 %v333
    %379 = vmatpush.msra.mxu0 %v332
    %380 = vmatpush.msra.mxu0 %v331
    %381 = vmatpush.msra.mxu0 %v330
    %382 = vmatpush.msra.mxu0 %v329
    %383 = vmatpush.msra.mxu0 %v328
    %384 = vmatmul.f32.gmra.mxu0 %v311
    %v385 = vpop.f32.mrf.mxu0
    %v386 = vadd.f32 %v366, %v385
    %387 = vdwg.mxu0
    %v388 = vtanh.pop %v386
    %v389 = vmul.f32 %v388, 2.0
    %390 = vst [vmem:[#allocation11] sm:$0xff] %v389
    // Predicated region
    $region50: #{tpu_custom_call.1} parent=1 // pred_check
      _
    $region51: #{tpu_custom_call.1} parent=1 // pred_check_branch
      %392 = sbr.rel (0) target = $region53
    $region52: #{tpu_custom_call.1} parent=1 // pred_region
      %394 = vsyncadd [#allocation4], 0
      %s396 = sshll.u32 [#allocation11], 4
      %s397 = int_to_ptr.vmem [resolvable:$true] %s396
      %s398 = sshll.u32 %s7, 4
      %s399 = int_to_ptr.hbm [resolvable:$true] %s398
      %401 = dma.vmem_to_hbm [thread:$0]  %s397, 128, %s399, [#allocation4]
    $region53: #{tpu_custom_call.1} parent=1 // pred_fallthru
      _
    // Predicated region
    $region54: #{tpu_custom_call.1} parent=1 // pred_check
      _
    $region55: #{tpu_custom_call.1} parent=1 // pred_check_branch
      %403 = sbr.rel (0) target = $region57
    $region56: #{tpu_custom_call.1} parent=1 // pred_region
      %405 = dma.done [#allocation4], 128
    $region57: #{tpu_custom_call.1} parent=1 // pred_fallthru
      _
    %406 = vsyncpa [#allocation3], 1
    %407 = vsyncpa [#allocation6], 1
    %408 = vsyncpa [#allocation9], 1
    %409 = vsyncpa [#allocation4], 1

</llo_original>
